<compile_context>
chip_gen: v7x
topology: tpu7x:2x2x1
jax: 0.10.0
libtpu: 0.0.40
codegen_flags: <defaults>
</compile_context>

<pallas_src>
import math
from functools import partial, lru_cache

import jax
import jax.numpy as jnp
from jax.experimental import pallas as pl
from jax.experimental.pallas import tpu as pltpu


_GELU_C = math.sqrt(2.0 / math.pi)


def _new_gelu_f32(x):
    # NewGELUActivation: 0.5*x*(1+tanh(sqrt(2/pi)*(x + 0.044715*x^3)))
    # x*x*x = two VPU muls (jnp.power(x, 3.0) can lower via exp/log on the
    # single EUP slot, which the tanh already needs).
    return 0.5 * x * (1.0 + jnp.tanh(_GELU_C * (x + 0.044715 * (x * x * x))))


def mlp_kernel(x_ref, w1_ref, b1_ref, w2_ref, b2_ref, o_ref, acc_ref):
    # Grid axis 0: row tiles ("parallel" -> sharded across v7x's 2 TCs).
    # Grid axis 1: hidden-dim slices ("arbitrary" reduction axis).
    #
    # x_ref:  (tm, C)  compute dtype (bf16/f32) -> fed straight to the MXU
    # w1_ref: (C, th)  b1_ref: (1, th)
    # w2_ref: (th, C)  b2_ref: (1, C)
    # o_ref:  (tm, C)  acc_ref: (tm, C) f32 scratch accumulator
    h_idx = pl.program_id(1)

    @pl.when(h_idx == 0)
    def _():
        acc_ref[...] = jnp.zeros_like(acc_ref)

    # c_fc slice: native-dtype operands on the MXU, f32 accumulation.
    h = jnp.dot(x_ref[...], w1_ref[...], preferred_element_type=jnp.float32)
    h = h + b1_ref[...].astype(jnp.float32)

    # NewGELU per H-slice in f32 on the VPU/EUP (correct on every generation;
    # v5e has no bf16 VPU/EUP).
    h = _new_gelu_f32(h)

    # c_proj slice contribution: cast h back to the weight dtype so the second
    # matmul stays on the full-rate MXU path; accumulate in f32.
    acc_ref[...] += jnp.dot(h.astype(w2_ref.dtype), w2_ref[...],
                            preferred_element_type=jnp.float32)

    @pl.when(h_idx == pl.num_programs(1) - 1)
    def _():
        # b_proj add + output cast only once, on the final H slice.
        # Dropout: identity in eval / inference mode.
        # TODO(synk): training-mode dropout (pltpu.prng_seed + prng_random_bits mask).
        o_ref[...] = (acc_ref[...] + b2_ref[...].astype(jnp.float32)
                      ).astype(o_ref.dtype)


def _round_up(a, b):
    return ((a + b - 1) // b) * b


@lru_cache(maxsize=None)
def _vmem_limit_bytes():
    """Generation-aware VMEM budget: ~75% of capacity (v5e/v6e 128 MiB -> 96,
    v7x 64 MiB/TC -> 48), leaving headroom for compiler-internal scratch and
    the (tm, th) f32 intermediate."""
    try:
        cap = int(pltpu.get_tpu_info().vmem_capacity_bytes)
    except Exception:
        cap = 64 * 1024 * 1024  # assume the smallest (v7x per-TC) if unknown
    return max(32 * 1024 * 1024, (cap * 3) // 4)


def _pick_tm(M, sublane_mult):
    """Row tile: as large as possible (amortize ~0.35us/grid step), prefer
    exact divisors of M (no pad copy / wasted MXU rows), keep >= 2 grid steps
    so both v7x TensorCores get work, and never shrink below 128 rows just to
    dodge padding on large problems."""
    best_padded = None
    for tm in (512, 256, 128, 64, 32, 16, 8):
        if tm % sublane_mult:
            continue
        if M % tm == 0 and M // tm >= 2:
            return tm
        if best_padded is None and pl.cdiv(M, tm) >= 2:
            best_padded = tm
        if tm <= 128 and M >= 1024:
            break  # big problem: accept padding rather than a tiny tile
    if best_padded is not None:
        return best_padded
    return max(sublane_mult, min(512, _round_up(M, sublane_mult)))


def _pick_th(H, C, itemsize, vmem_budget):
    """Hidden-dim slice: keep both weight matrices resident (single H step,
    single-buffered) when they comfortably fit the VMEM budget; otherwise
    stream H in 128-multiple slices so v7x's 64 MiB/TC is never blown."""
    resident_bytes = 2 * H * C * itemsize
    if H <= 1024 or resident_bytes <= vmem_budget // 3:
        return H
    for th in (512, 256, 128):
        if H % th == 0:
            return th
    return H  # awkward H: fall back to fully-resident weights


@partial(jax.jit, static_argnames=("compute_dtype", "tm", "th"))
def mlp_forward(x, w_fc, b_fc, w_proj, b_proj, *, compute_dtype=None,
                tm=None, th=None):
    """x: (B, T, C).  w_fc: (C, 4C), b_fc: (4C,), w_proj: (4C, C), b_proj: (C,).

    compute_dtype: dtype of the MXU operands (bf16 recommended on all
    generations); accumulation is always f32.  Weights must be f32/bf16 —
    quantized int8/fp8 weights need a scale-aware path, not this kernel.
    """
    B, T, C = x.shape
    H = w_fc.shape[1]
    M = B * T

    assert jnp.issubdtype(w_fc.dtype, jnp.floating) and \
        jnp.issubdtype(w_proj.dtype, jnp.floating), "weights must be float"

    cd = jnp.dtype(compute_dtype) if compute_dtype is not None else jnp.dtype(x.dtype)
    out_dtype = x.dtype

    # Sublane packing: 8 rows (f32), 16 (bf16), 32 (int8/fp8).
    sublane_mult = 8 * max(1, 4 // cd.itemsize)
    vmem_budget = _vmem_limit_bytes()

    if tm is None:
        tm = _pick_tm(M, sublane_mult)
    if th is None:
        th = _pick_th(H, C, cd.itemsize, vmem_budget)
    if H % th:
        th = H  # guard: the H grid axis must tile H exactly

    x2d = x.reshape(M, C).astype(cd)
    M_pad = _round_up(M, tm)
    if M_pad != M:
        x2d = jnp.pad(x2d, ((0, M_pad - M), (0, 0)))

    w1 = w_fc.astype(cd)
    w2 = w_proj.astype(cd)
    b1 = b_fc.reshape(1, H).astype(jnp.float32)
    b2 = b_proj.reshape(1, C).astype(jnp.float32)

    grid = (M_pad // tm, H // th)

    # Blocks whose index_map is constant over the whole grid are DMAed once —
    # single-buffer them so the default 2-deep pipeline doesn't double their
    # VMEM footprint.  Streamed weight slices (th < H) keep double buffering.
    resident = pl.Buffered(1)
    weights_resident = (th == H)

    def _wspec(shape, imap):
        if weights_resident:
            return pl.BlockSpec(shape, imap, pipeline_mode=resident)
        return pl.BlockSpec(shape, imap)

    out2d = pl.pallas_call(
        mlp_kernel,
        out_shape=jax.ShapeDtypeStruct((M_pad, C), out_dtype),
        grid_spec=pltpu.PrefetchScalarGridSpec(
            num_scalar_prefetch=0,
            grid=grid,
            in_specs=[
                pl.BlockSpec((tm, C), lambda i, h: (i, 0)),               # x tile
                _wspec((C, th), lambda i, h: (0, h)),                     # W_fc slice
                _wspec((1, th), lambda i, h: (0, h)),                     # b_fc slice
                _wspec((th, C), lambda i, h: (h, 0)),                     # W_proj slice
                pl.BlockSpec((1, C), lambda i, h: (0, 0),
                             pipeline_mode=resident),                     # b_proj
            ],
            out_specs=pl.BlockSpec((tm, C), lambda i, h: (i, 0)),
            scratch_shapes=[pltpu.VMEM((tm, C), jnp.float32)],            # f32 accumulator
        ),
        compiler_params=pltpu.CompilerParams(
            dimension_semantics=("parallel", "arbitrary"),
            vmem_limit_bytes=vmem_budget,
        ),
    )(x2d, w1, b1, w2, b2)

    # TODO(synk): for decode / small-M calls, hide the weight prologue via
    # cross-call weight prefetch (P10: start the HBM->VMEM DMA in a prior
    # pallas_call and return sem + VMEM ref) instead of re-DMAing per call.

    return out2d[:M].reshape(B, T, C)


def reference_mlp(x, w_fc, b_fc, w_proj, b_proj):
    h = jnp.einsum("btc,ch->bth", x.astype(jnp.float32),
                   w_fc.astype(jnp.float32)) + b_fc
    h = _new_gelu_f32(h)
    y = jnp.einsum("bth,hc->btc", h, w_proj.astype(jnp.float32)) + b_proj
    return y.astype(x.dtype)


if __name__ == "__main__":
    # Small shapes consistent with the module: batch=2, seq=8, n_embd=32 (hidden=128)
    B, T, C = 2, 8, 32
    H = 4 * C

    key = jax.random.PRNGKey(0)
    kx, k1, k2, k3, k4 = jax.random.split(key, 5)

    x = jax.random.normal(kx, (B, T, C), dtype=jnp.float32)

    # Deterministic parameter init (same shapes as nn.Linear, stored transposed
    # kernel-side as (in, out)); scale mimics PyTorch's default uniform fan-in bound.
    b1 = 1.0 / math.sqrt(C)
    b2 = 1.0 / math.sqrt(H)
    w_fc = jax.random.uniform(k1, (C, H), jnp.float32, -b1, b1)
    b_fc = jax.random.uniform(k2, (H,), jnp.float32, -b1, b1)
    w_proj = jax.random.uniform(k3, (H, C), jnp.float32, -b2, b2)
    b_proj = jax.random.uniform(k4, (C,), jnp.float32, -b2, b2)

    y_ref = reference_mlp(x, w_fc, b_fc, w_proj, b_proj)

    # f32 MXU-operand path (exact check).
    y = mlp_forward(x, w_fc, b_fc, w_proj, b_proj)
    jax.block_until_ready(y)
    assert y.shape == (B, T, C), y.shape
    assert jnp.allclose(y, y_ref, atol=1e-4, rtol=1e-4), "f32 mismatch vs JAX reference"

    # bf16 MXU-operand path (recommended fast path on v5e/v6e/v7x) — loose
    # tolerance purely because of bf16 rounding, not a kernel difference.
    y_bf16 = mlp_forward(x, w_fc, b_fc, w_proj, b_proj,
                         compute_dtype=jnp.bfloat16)
    jax.block_until_ready(y_bf16)
    assert y_bf16.shape == (B, T, C), y_bf16.shape
    assert float(jnp.max(jnp.abs(y_bf16.astype(jnp.float32) - y_ref))) < 1e-1, \
        "bf16 path mismatch vs JAX reference"

    print("KERNEL_OK")
</pallas_src>

<mosaic_0001>
module attributes {stable_mosaic.version = 11 : i64} {
  func.func @mlp_kernel(%arg0: i32, %arg1: i32, %arg2: memref<8x32xf32, #tpu.memory_space<vmem>>, %arg3: memref<32x128xf32, #tpu.memory_space<vmem>>, %arg4: memref<1x128xf32, #tpu.memory_space<vmem>>, %arg5: memref<128x32xf32, #tpu.memory_space<vmem>>, %arg6: memref<1x32xf32, #tpu.memory_space<vmem>>, %arg7: memref<8x32xf32, #tpu.memory_space<vmem>>, %arg8: memref<8x32xf32, #tpu.memory_space<vmem>>) attributes {dimension_semantics = [#tpu.dimension_semantics<parallel>, #tpu.dimension_semantics<arbitrary>], iteration_bounds = array<i64: 2, 1>, scalar_prefetch = 0 : i64, scratch_operands = 1 : i64, tpu.core_type = #tpu.core_type<tc>, window_params = [{transform_indices = @transform_0, window_bounds = array<i64: 8, 32>}, {pipeline_mode = #tpu.pipeline_mode<synchronous>, transform_indices = @transform_1, window_bounds = array<i64: 32, 128>}, {pipeline_mode = #tpu.pipeline_mode<synchronous>, transform_indices = @transform_2, window_bounds = array<i64: 1, 128>}, {pipeline_mode = #tpu.pipeline_mode<synchronous>, transform_indices = @transform_3, window_bounds = array<i64: 128, 32>}, {pipeline_mode = #tpu.pipeline_mode<synchronous>, transform_indices = @transform_4, window_bounds = array<i64: 1, 32>}, {transform_indices = @transform_5, window_bounds = array<i64: 8, 32>}]} {
    %c0_i32 = arith.constant 0 : i32
    %0 = arith.cmpi eq, %arg1, %c0_i32 : i32
    %1 = arith.extui %0 : i1 to i32
    %c0_i32_0 = arith.constant 0 : i32
    %2 = arith.cmpi ne, %1, %c0_i32_0 : i32
    scf.if %2 {
      %cst_19 = arith.constant 0.000000e+00 : f32
      %30 = vector.broadcast %cst_19 : f32 to vector<8x32xf32>
      %c0_20 = arith.constant 0 : index
      %c0_21 = arith.constant 0 : index
      %31 = vector.load %arg8[%c0_20, %c0_21] : memref<8x32xf32, #tpu.memory_space<vmem>>, vector<8x32xf32>
      tpu.vector_store %arg8[%c0_20, %c0_21], %30 {strides = array<i32>} : memref<8x32xf32, #tpu.memory_space<vmem>>, vector<8x32xf32>,
    } else {
    }
    %c0 = arith.constant 0 : index
    %c0_1 = arith.constant 0 : index
    %3 = vector.load %arg2[%c0, %c0_1] : memref<8x32xf32, #tpu.memory_space<vmem>>, vector<8x32xf32>
    %c0_2 = arith.constant 0 : index
    %c0_3 = arith.constant 0 : index
    %4 = vector.load %arg3[%c0_2, %c0_3] : memref<32x128xf32, #tpu.memory_space<vmem>>, vector<32x128xf32>
    %cst = arith.constant dense<0.000000e+00> : vector<8x128xf32>
    %5 = tpu.matmul %3, %4, %cst {dimension_numbers = #tpu.dot_dimension_numbers<[1], [0], [0], [1], [0, 0, 1, 1], [], []>} : vector<8x32xf32>, vector<32x128xf32>, vector<8x128xf32> -> vector<8x128xf32>
    %c0_4 = arith.constant 0 : index
    %c0_5 = arith.constant 0 : index
    %6 = vector.load %arg4[%c0_4, %c0_5] : memref<1x128xf32, #tpu.memory_space<vmem>>, vector<1x128xf32>
    %7 = vector.broadcast %6 : vector<1x128xf32> to vector<8x128xf32>
    %8 = arith.addf %5, %7 : vector<8x128xf32>
    %cst_6 = arith.constant 5.000000e-01 : f32
    %9 = vector.broadcast %cst_6 : f32 to vector<8x128xf32>
    %10 = arith.mulf %9, %8 : vector<8x128xf32>
    %11 = arith.mulf %8, %8 : vector<8x128xf32>
    %12 = arith.mulf %11, %8 : vector<8x128xf32>
    %cst_7 = arith.constant 4.471500e-02 : f32
    %13 = vector.broadcast %cst_7 : f32 to vector<8x128xf32>
    %14 = arith.mulf %13, %12 : vector<8x128xf32>
    %15 = arith.addf %8, %14 : vector<8x128xf32>
    %cst_8 = arith.constant 0.797884583 : f32
    %16 = vector.broadcast %cst_8 : f32 to vector<8x128xf32>
    %17 = arith.mulf %16, %15 : vector<8x128xf32>
    %18 = math.tanh %17 : vector<8x128xf32>
    %cst_9 = arith.constant 1.000000e+00 : f32
    %19 = vector.broadcast %cst_9 : f32 to vector<8x128xf32>
    %20 = arith.addf %19, %18 : vector<8x128xf32>
    %21 = arith.mulf %10, %20 : vector<8x128xf32>
    %c0_10 = arith.constant 0 : index
    %c0_11 = arith.constant 0 : index
    %22 = vector.load %arg8[%c0_10, %c0_11] : memref<8x32xf32, #tpu.memory_space<vmem>>, vector<8x32xf32>
    %c0_12 = arith.constant 0 : index
    %c0_13 = arith.constant 0 : index
    %23 = vector.load %arg5[%c0_12, %c0_13] : memref<128x32xf32, #tpu.memory_space<vmem>>, vector<128x32xf32>
    %cst_14 = arith.constant dense<0.000000e+00> : vector<8x32xf32>
    %24 = tpu.matmul %21, %23, %cst_14 {dimension_numbers = #tpu.dot_dimension_numbers<[1], [0], [0], [1], [0, 0, 1, 1], [], []>} : vector<8x128xf32>, vector<128x32xf32>, vector<8x32xf32> -> vector<8x32xf32>
    %25 = arith.addf %22, %24 : vector<8x32xf32>
    %c0_15 = arith.constant 0 : index
    %c0_16 = arith.constant 0 : index
    %26 = vector.load %arg8[%c0_15, %c0_16] : memref<8x32xf32, #tpu.memory_space<vmem>>, vector<8x32xf32>
    tpu.vector_store %arg8[%c0_15, %c0_16], %25 {strides = array<i32>} : memref<8x32xf32, #tpu.memory_space<vmem>>, vector<8x32xf32>,
    %c0_i32_17 = arith.constant 0 : i32
    %27 = arith.cmpi eq, %arg1, %c0_i32_17 : i32
    %28 = arith.extui %27 : i1 to i32
    %c0_i32_18 = arith.constant 0 : i32
    %29 = arith.cmpi ne, %28, %c0_i32_18 : i32
    scf.if %29 {
      %c0_19 = arith.constant 0 : index
      %c0_20 = arith.constant 0 : index
      %30 = vector.load %arg8[%c0_19, %c0_20] : memref<8x32xf32, #tpu.memory_space<vmem>>, vector<8x32xf32>
      %c0_21 = arith.constant 0 : index
      %c0_22 = arith.constant 0 : index
      %31 = vector.load %arg6[%c0_21, %c0_22] : memref<1x32xf32, #tpu.memory_space<vmem>>, vector<1x32xf32>
      %32 = vector.broadcast %31 : vector<1x32xf32> to vector<8x32xf32>
      %33 = arith.addf %30, %32 : vector<8x32xf32>
      %c0_23 = arith.constant 0 : index
      %c0_24 = arith.constant 0 : index
      %34 = vector.load %arg7[%c0_23, %c0_24] : memref<8x32xf32, #tpu.memory_space<vmem>>, vector<8x32xf32>
      tpu.vector_store %arg7[%c0_23, %c0_24], %33 {strides = array<i32>} : memref<8x32xf32, #tpu.memory_space<vmem>>, vector<8x32xf32>,
    } else {
    }
    return
  }
  func.func @transform_0(%arg0: i32, %arg1: i32) -> (i32, i32) {
    %c0_i32 = arith.constant 0 : i32
    %c0_i32_0 = arith.constant 0 : i32
    return %arg0, %c0_i32 : i32, i32
  }
  func.func @transform_1(%arg0: i32, %arg1: i32) -> (i32, i32) {
    %c0_i32 = arith.constant 0 : i32
    %c0_i32_0 = arith.constant 0 : i32
    return %c0_i32, %arg1 : i32, i32
  }
  func.func @transform_2(%arg0: i32, %arg1: i32) -> (i32, i32) {
    %c0_i32 = arith.constant 0 : i32
    %c0_i32_0 = arith.constant 0 : i32
    return %c0_i32, %arg1 : i32, i32
  }
  func.func @transform_3(%arg0: i32, %arg1: i32) -> (i32, i32) {
    %c0_i32 = arith.constant 0 : i32
    %c0_i32_0 = arith.constant 0 : i32
    return %arg1, %c0_i32 : i32, i32
  }
  func.func @transform_4(%arg0: i32, %arg1: i32) -> (i32, i32) {
    %c0_i32 = arith.constant 0 : i32
    %c0_i32_0 = arith.constant 0 : i32
    %c0_i32_1 = arith.constant 0 : i32
    return %c0_i32, %c0_i32_0 : i32, i32
  }
  func.func @transform_5(%arg0: i32, %arg1: i32) -> (i32, i32) {
    %c0_i32 = arith.constant 0 : i32
    %c0_i32_0 = arith.constant 0 : i32
    return %arg0, %c0_i32 : i32, i32
  }
}

</mosaic_0001>

<llo_original>
// kernel: mlp_forward.1
$region0: #{mlp_forward.1}
  #allocation0 [shape = 'u32[]', space=smem, size = 0x4, offset = 0x4, fixed_abs, tag = 'smem constant byte address 0x4 - core index']
  #allocation1 [shape = 'u32[144,128]{1,0:T(1,128)}', space=vmem, size = 0x12000, scoped, tag = 'internal scratch']
  #allocation2 [shape = 'f32[8,32]{1,0:T(8,128)}', space=vmem, size = 0x1000, scoped, tag = 'scratch operand']
  %s0 = inlined_call_operand.vmem [shape: f32[16,32], index: 0, kind: input, shape index: {}]
  %s1 = inlined_call_operand.vmem [shape: f32[32,128], index: 1, kind: input, shape index: {}]
  %s2 = inlined_call_operand.vmem [shape: f32[1,128], index: 2, kind: input, shape index: {}]
  %s3 = inlined_call_operand.vmem [shape: f32[128,32], index: 3, kind: input, shape index: {}]
  %s4 = inlined_call_operand.vmem [shape: f32[1,32], index: 4, kind: input, shape index: {}]
  %s5 = inlined_call_operand.hbm [shape: f32[16,32], index: 5, kind: output, shape index: {}]
  %s6 = sld [smem:[#allocation0]]
  $region61: #{mlp_forward.1} parent=0
    _
  %s8 = ssub.s32 1, %s6
  %s9 = scalar_select 0, %s8, %s6
  $region1: #{mlp_forward.1} parent=0
    #allocation3 [shape = 'u8[8192]{0}', space=vmem, size = 0x2000, scoped, tag = 'output window, operand 0']
    #allocation4 [shape = 's32[2]{0}', space=sflag, size = 0x8, scoped, tag = 'scoped memory for mlp_forward.1']
    %10 = vsyncpa [#allocation4], 0
    %s11 = scalar_lea.sflag [#allocation4], 1
    %12 = vsyncpa %s11, 0
    loop: start=0, step=1, limit=4
    $region2: #{mlp_forward.1} parent=1 // loop_pre_header
      _
    $region3: #{mlp_forward.1} parent=1 // loop_header
      %s14 = sphi 0, %s18
      %p15 = scmp.ge.s32.totalorder %s14, 4
      %s21 = sphi 0, %s33
      %s22 = sphi 0, %s29
      %s23 = sphi 0, %s21
      %s24 = sphi 0, %s22
      %s25 = sphi 0, %s23
      %s26 = sphi 0, %s24
      %s36 = sphi 0, %s38
      %s39 = sphi 0, %s36
      %s40 = sphi 0, %s39
      %s56 = sphi 0, %s40
      %s62 = sphi 0, %s64
      %s65 = sphi 0, %s62
      %s66 = sphi 0, %s65
      %s82 = sphi 0, %s66
      %s88 = sphi 0, %s90
      %s91 = sphi 0, %s88
      %s92 = sphi 0, %s91
      %s108 = sphi 0, %s92
      %s114 = sphi 0, %s116
      %s117 = sphi 0, %s114
      %s118 = sphi 0, %s117
      %s134 = sphi 0, %s118
      %s138 = sphi 0, %s138
      %s140 = sphi 0, %s138
      %s141 = sphi 0, %s140
      %s155 = sphi 0, %s141
      %s161 = sphi 0, %s163
      %s164 = sphi 0, %s161
      %s165 = sphi 0, %s164
      %s181 = sphi 0, %s165
    $region4: #{mlp_forward.1} parent=1 // loop_header_branch
      %17 = sbr.rel (%p15) target = $region8
    $region5: #{mlp_forward.1} parent=1 // loop_body
      %s19 = ssub.s32 %s14, 1
      %s20 = ssub.s32 %s14, 2
      %s27 = sadd.s32 1, %s22
      %p28 = scmp.ge.s32.totalorder %s27, 1
      %s29 = scalar_select %p28, 0, %s27
      %s30 = sadd.s32 1, %s21
      %s31 = scalar_select %p28, %s30, %s21
      %p32 = scmp.ge.s32.totalorder %s31, 2
      %s33 = scalar_select %p32, 0, %s31
      %s34 = ssub.s32 %s21, %s33
      %p35 = scmp.eq.s32.totalorder %s34, 0
      %s37 = sadd.s32 %s36, 1
      %s38 = scalar_select %p35, %s36, %s37
      %p41 = pneg %p35
      %p42 = scmp.eq.s32.totalorder %s14, 1
      %p43 = por %p41, %p42
      %p44 = scmp.ne.s32.totalorder %s36, %s39
      %p45 = scmp.eq.s32.totalorder %s14, 0
      %p46 = por %p44, %p45
      %p47 = scmp.ne.s32.totalorder %s36, %s39
      %p48 = scmp.eq.s32.totalorder %s19, 1
      %p49 = por %p47, %p48
      %p50 = scmp.ne.s32.totalorder %s39, %s40
      %p51 = scmp.eq.s32.totalorder %s19, 0
      %p52 = por %p50, %p51
      %p53 = scmp.ne.s32.totalorder %s39, %s40
      %p54 = scmp.eq.s32.totalorder %s20, 1
      %p55 = por %p53, %p54
      %p57 = scmp.ne.s32.totalorder %s40, %s56
      %p58 = scmp.eq.s32.totalorder %s20, 0
      %p59 = por %p57, %p58
      %s60 = ssub.s32 %s22, %s29
      %p61 = scmp.eq.s32.totalorder %s60, 0
      %s63 = sadd.s32 %s62, 1
      %s64 = scalar_select %p61, %s62, %s63
      %p67 = pneg %p61
      %p68 = scmp.eq.s32.totalorder %s14, 1
      %p69 = por %p67, %p68
      %p70 = scmp.ne.s32.totalorder %s62, %s65
      %p71 = scmp.eq.s32.totalorder %s14, 0
      %p72 = por %p70, %p71
      %p73 = scmp.ne.s32.totalorder %s62, %s65
      %p74 = scmp.eq.s32.totalorder %s19, 1
      %p75 = por %p73, %p74
      %p76 = scmp.ne.s32.totalorder %s65, %s66
      %p77 = scmp.eq.s32.totalorder %s19, 0
      %p78 = por %p76, %p77
      %p79 = scmp.ne.s32.totalorder %s65, %s66
      %p80 = scmp.eq.s32.totalorder %s20, 1
      %p81 = por %p79, %p80
      %p83 = scmp.ne.s32.totalorder %s66, %s82
      %p84 = scmp.eq.s32.totalorder %s20, 0
      %p85 = por %p83, %p84
      %s86 = ssub.s32 %s22, %s29
      %p87 = scmp.eq.s32.totalorder %s86, 0
      %s89 = sadd.s32 %s88, 1
      %s90 = scalar_select %p87, %s88, %s89
      %p93 = pneg %p87
      %p94 = scmp.eq.s32.totalorder %s14, 1
      %p95 = por %p93, %p94
      %p96 = scmp.ne.s32.totalorder %s88, %s91
      %p97 = scmp.eq.s32.totalorder %s14, 0
      %p98 = por %p96, %p97
      %p99 = scmp.ne.s32.totalorder %s88, %s91
      %p100 = scmp.eq.s32.totalorder %s19, 1
      %p101 = por %p99, %p100
      %p102 = scmp.ne.s32.totalorder %s91, %s92
      %p103 = scmp.eq.s32.totalorder %s19, 0
      %p104 = por %p102, %p103
      %p105 = scmp.ne.s32.totalorder %s91, %s92
      %p106 = scmp.eq.s32.totalorder %s20, 1
      %p107 = por %p105, %p106
      %p109 = scmp.ne.s32.totalorder %s92, %s108
      %p110 = scmp.eq.s32.totalorder %s20, 0
      %p111 = por %p109, %p110
      %s112 = ssub.s32 %s22, %s29
      %p113 = scmp.eq.s32.totalorder %s112, 0
      %s115 = sadd.s32 %s114, 1
      %s116 = scalar_select %p113, %s114, %s115
      %p119 = pneg %p113
      %p120 = scmp.eq.s32.totalorder %s14, 1
      %p121 = por %p119, %p120
      %p122 = scmp.ne.s32.totalorder %s114, %s117
      %p123 = scmp.eq.s32.totalorder %s14, 0
      %p124 = por %p122, %p123
      %p125 = scmp.ne.s32.totalorder %s114, %s117
      %p126 = scmp.eq.s32.totalorder %s19, 1
      %p127 = por %p125, %p126
      %p128 = scmp.ne.s32.totalorder %s117, %s118
      %p129 = scmp.eq.s32.totalorder %s19, 0
      %p130 = por %p128, %p129
      %p131 = scmp.ne.s32.totalorder %s117, %s118
      %p132 = scmp.eq.s32.totalorder %s20, 1
      %p133 = por %p131, %p132
      %p135 = scmp.ne.s32.totalorder %s118, %s134
      %p136 = scmp.eq.s32.totalorder %s20, 0
      %p137 = por %p135, %p136
      %s139 = sadd.s32 %s138, 1
      %p142 = scmp.eq.s32.totalorder %s14, 1
      %p143 = scmp.ne.s32.totalorder %s138, %s140
      %p144 = scmp.eq.s32.totalorder %s14, 0
      %p145 = por %p143, %p144
      %p146 = scmp.ne.s32.totalorder %s138, %s140
      %p147 = scmp.eq.s32.totalorder %s19, 1
      %p148 = por %p146, %p147
      %p149 = scmp.ne.s32.totalorder %s140, %s141
      %p150 = scmp.eq.s32.totalorder %s19, 0
      %p151 = por %p149, %p150
      %p152 = scmp.ne.s32.totalorder %s140, %s141
      %p153 = scmp.eq.s32.totalorder %s20, 1
      %p154 = por %p152, %p153
      %p156 = scmp.ne.s32.totalorder %s141, %s155
      %p157 = scmp.eq.s32.totalorder %s20, 0
      %p158 = por %p156, %p157
      %s159 = ssub.s32 %s21, %s33
      %p160 = scmp.eq.s32.totalorder %s159, 0
      %s162 = sadd.s32 %s161, 1
      %s163 = scalar_select %p160, %s161, %s162
      %p166 = pneg %p160
      %p167 = scmp.eq.s32.totalorder %s14, 1
      %p168 = por %p166, %p167
      %p169 = scmp.ne.s32.totalorder %s161, %s164
      %p170 = scmp.eq.s32.totalorder %s14, 0
      %p171 = por %p169, %p170
      %p172 = scmp.ne.s32.totalorder %s161, %s164
      %p173 = scmp.eq.s32.totalorder %s19, 1
      %p174 = por %p172, %p173
      %p175 = scmp.ne.s32.totalorder %s164, %s165
      %p176 = scmp.eq.s32.totalorder %s19, 0
      %p177 = por %p175, %p176
      %p178 = scmp.ne.s32.totalorder %s164, %s165
      %p179 = scmp.eq.s32.totalorder %s20, 1
      %p180 = por %p178, %p179
      %p182 = scmp.ne.s32.totalorder %s165, %s181
      %p183 = scmp.eq.s32.totalorder %s20, 0
      %p184 = por %p182, %p183
      %p185 = scmp.le.s32.totalorder 1, %s14
      %p186 = scmp.lt.s32.totalorder %s14, 3
      %p187 = pnand %p185, %p186
      %p188 = pneg %p187
      // Predicated region
      $region9: #{mlp_forward.1} parent=5 // pred_check
        _
      $region10: #{mlp_forward.1} parent=5 // pred_check_branch
        %190 = sbr.rel (%p187) target = $region12
      $region11: #{mlp_forward.1} parent=5 // pred_region
        %s191 = ssub.s32 %s14, 1
        // Predicated region
        $region13: #{mlp_forward.1} parent=11 // pred_check
          %p192 = pneg %p78
        $region14: #{mlp_forward.1} parent=11 // pred_check_branch
          %194 = sbr.rel (%p192) target = $region16
        $region15: #{mlp_forward.1} parent=11 // pred_region
          %p195 = scmp.lt.s32.totalorder %s24, 0
          %s196 = scalar_select %p195, %s24, 0
          %s197 = smul.addr %s196, 8
          %s198 = scalar_lea.vmem %s1, %s197
        $region16: #{mlp_forward.1} parent=11 // pred_fallthru
          _
        // Predicated region
        $region17: #{mlp_forward.1} parent=11 // pred_check
          %p199 = pneg %p104
        $region18: #{mlp_forward.1} parent=11 // pred_check_branch
          %201 = sbr.rel (%p199) target = $region20
        $region19: #{mlp_forward.1} parent=11 // pred_region
          %p202 = scmp.lt.s32.totalorder %s24, 0
          %s203 = scalar_select %p202, %s24, 0
          %s204 = scalar_lea.vmem %s2, %s203
        $region20: #{mlp_forward.1} parent=11 // pred_fallthru
          _
        // Predicated region
        $region21: #{mlp_forward.1} parent=11 // pred_check
          %p205 = pneg %p130
        $region22: #{mlp_forward.1} parent=11 // pred_check_branch
          %207 = sbr.rel (%p205) target = $region24
        $region23: #{mlp_forward.1} parent=11 // pred_region
          %s208 = smul.u32 16, %s24
          %p209 = scmp.lt.s32.totalorder %s208, 15
          %s210 = scalar_select %p209, %s208, 15
          %s211 = smul.addr %s210, 8
          %s212 = scalar_lea.vmem %s3, %s211
          %s213 = smul.u32 16, %s24
        $region24: #{mlp_forward.1} parent=11 // pred_fallthru
          _
        // Predicated region
        $region25: #{mlp_forward.1} parent=11 // pred_check
          %p214 = pneg %p151
        $region26: #{mlp_forward.1} parent=11 // pred_check_branch
          %216 = sbr.rel (%p214) target = $region28
        $region27: #{mlp_forward.1} parent=11 // pred_region
          _
        $region28: #{mlp_forward.1} parent=11 // pred_fallthru
          _
      $region12: #{mlp_forward.1} parent=5 // pred_fallthru
        _
      %p217 = scmp.lt.s32.totalorder %s14, 2
      // Predicated region
      $region29: #{mlp_forward.1} parent=5 // pred_check
        %p218 = pneg %p217
      $region30: #{mlp_forward.1} parent=5 // pred_check_branch
        %220 = sbr.rel (%p218) target = $region32
      $region31: #{mlp_forward.1} parent=5 // pred_region
        // Predicated region
        $region33: #{mlp_forward.1} parent=31 // pred_check
          %p221 = pneg %p46
        $region34: #{mlp_forward.1} parent=31 // pred_check_branch
          %223 = sbr.rel (%p221) target = $region36
        $region35: #{mlp_forward.1} parent=31 // pred_region
          %p224 = scmp.lt.s32.totalorder %s21, 1
          %s225 = scalar_select %p224, %s21, 1
          %s226 = smul.addr %s225, 8
          %s227 = scalar_lea.vmem %s0, %s226
        $region36: #{mlp_forward.1} parent=31 // pred_fallthru
          _
      $region32: #{mlp_forward.1} parent=5 // pred_fallthru
        _
      %p228 = scmp.le.s32.totalorder 1, %s14
      %p229 = scmp.lt.s32.totalorder %s14, 3
      %p230 = pnand %p228, %p229
      %p231 = pneg %p230
      // Predicated region
      $region37: #{mlp_forward.1} parent=5 // pred_check
        _
      $region38: #{mlp_forward.1} parent=5 // pred_check_branch
        %233 = sbr.rel (%p230) target = $region40
      $region39: #{mlp_forward.1} parent=5 // pred_region
        %s234 = ssub.s32 %s14, 1
        %p235 = scmp.lt.s32.totalorder %s23, 1
        %s236 = scalar_select %p235, %s23, 1
        %s237 = smul.addr %s236, 8
        %s238 = scalar_lea.vmem %s0, %s237
        %p239 = pneg %p52
        %p240 = pneg %p49
        %p241 = scmp.lt.s32.totalorder %s24, 0
        %s242 = scalar_select %p241, %s24, 0
        %s243 = smul.addr %s242, 8
        %s244 = scalar_lea.vmem %s1, %s243
        %p245 = pneg %p78
        %p246 = pneg %p75
        %p247 = scmp.lt.s32.totalorder %s24, 0
        %s248 = scalar_select %p247, %s24, 0
        %s249 = scalar_lea.vmem %s2, %s248
        %p250 = pneg %p104
        %p251 = pneg %p101
        %s252 = smul.u32 16, %s24
        %p253 = scmp.lt.s32.totalorder %s252, 15
        %s254 = scalar_select %p253, %s252, 15
        %s255 = smul.addr %s254, 8
        %s256 = scalar_lea.vmem %s3, %s255
        %p257 = pneg %p130
        %p258 = pneg %p127
        %p259 = pneg %p151
        %p260 = pneg %p148
        %p261 = pneg %p177
        %p262 = pneg %p174
        %s263 = sand.u32 %s164, 1
        %s264 = scalar_lea.sflag [#allocation4], %s263
        %s265 = sand.u32 %s164, 1
        %s266 = smul.addr %s265, 8
        %s267 = scalar_lea.vmem [#allocation3], %s266
        %p268 = scmp.lt.s32.totalorder %s23, 1
        %s269 = scalar_select %p268, %s23, 1
        %s270 = smul.addr %s269, 8
        %s271 = scalar_lea.vmem %s0, %s270
        %p272 = scmp.lt.s32.totalorder %s24, 0
        %s273 = scalar_select %p272, %s24, 0
        %s274 = smul.addr %s273, 8
        %s275 = scalar_lea.vmem %s1, %s274
        %p276 = scmp.lt.s32.totalorder %s24, 0
        %s277 = scalar_select %p276, %s24, 0
        %s278 = scalar_lea.vmem %s2, %s277
        %s279 = smul.u32 16, %s24
        %p280 = scmp.lt.s32.totalorder %s279, 15
        %s281 = scalar_select %p280, %s279, 15
        %s282 = smul.addr %s281, 8
        %s283 = scalar_lea.vmem %s3, %s282
        %s284 = smul.u32 16, %s24
        %p285 = scmp.eq.s32.totalorder %s24, 0
        // Predicated region
        $region41: #{mlp_forward.1} parent=39 // pred_check
          %p286 = pneg %p285
        $region42: #{mlp_forward.1} parent=39 // pred_check_branch
          %288 = sbr.rel (%p286) target = $region44
        $region43: #{mlp_forward.1} parent=39 // pred_region
          %vm289 = vcmask 261120
          %290 = vst.msk [vmem:[#allocation2] sm:$0xff] %vm289, 0.0
        $region44: #{mlp_forward.1} parent=39 // pred_fallthru
          _
        %v291 = vld [vmem:[%s271] sm:$0xff]
        %v292 = vld [vmem:[%s275] sm:$0xff]
        %v293 = vld [vmem:[%s275 + $0x8] sm:$0xff]
        %v294 = vld [vmem:[%s275 + $0x10] sm:$0xff]
        %v295 = vld [vmem:[%s275 + $0x18] sm:$0xff]
        %v296 = vld [vmem:[%s278] sm:$0x1]
        %v298 = vlaneseq
        %v299 = vshrl.u32 %v298, 7
        %v300 = vsub.s32 0, %v299
        %v301 = vrot.slane %v296, %v300
        %vm303 = vcmask 261120
        %v305 = vsel %vm303, %v291, 0
        %307 = vmatprep.subr.mxu0 0.0
        %308 = vmatpush1.msra.mxu0 %v292
        %309 = vmatprep.subr.mxu0 0.0
        %310 = vmatpush1.msra.mxu0 %v293
        %311 = vmatprep.subr.mxu0 0.0
        %312 = vmatpush1.msra.mxu0 %v294
        %313 = vmatprep.subr.mxu0 0.0
        %314 = vmatpush1.msra.mxu0 %v295
        %315 = vmatprep.subr.mxu0 0.0
        %316 = vmatpush1.msra.mxu0 0.0
        %317 = vmatprep.subr.mxu0 0.0
        %318 = vmatpush1.msra.mxu0 0.0
        %319 = vmatprep.subr.mxu0 0.0
        %320 = vmatpush1.msra.mxu0 0.0
        %321 = vmatprep.subr.mxu0 0.0
        %322 = vmatpush1.msra.mxu0 0.0
        %323 = vmatprep.subr.mxu0 0.0
        %324 = vmatpush1.msra.mxu0 0.0
        %325 = vmatprep.subr.mxu0 0.0
        %326 = vmatpush1.msra.mxu0 0.0
        %327 = vmatprep.subr.mxu0 0.0
        %328 = vmatpush1.msra.mxu0 0.0
        %329 = vmatprep.subr.mxu0 0.0
        %330 = vmatpush1.msra.mxu0 0.0
        %331 = vmatprep.subr.mxu0 0.0
        %332 = vmatpush1.msra.mxu0 0.0
        %333 = vmatprep.subr.mxu0 0.0
        %334 = vmatpush1.msra.mxu0 0.0
        %335 = vmatprep.subr.mxu0 0.0
        %336 = vmatpush1.msra.mxu0 0.0
        %337 = vmatprep.subr.mxu0 0.0
        %338 = vmatpush1.msra.mxu0 0.0
        %339 = vmatprep.subr.mxu0 0.0
        %340 = vmatpush1.msra.mxu0 0.0
        %341 = vmatprep.subr.mxu0 0.0
        %342 = vmatpush1.msra.mxu0 0.0
        %343 = vmatprep.subr.mxu0 0.0
        %344 = vmatpush1.msra.mxu0 0.0
        %345 = vmatprep.subr.mxu0 0.0
        %346 = vmatpush1.msra.mxu0 0.0
        %347 = vmatprep.subr.mxu0 0.0
        %348 = vmatpush1.msra.mxu0 0.0
        %349 = vmatprep.subr.mxu0 0.0
        %350 = vmatpush1.msra.mxu0 0.0
        %351 = vmatprep.subr.mxu0 0.0
        %352 = vmatpush1.msra.mxu0 0.0
        %353 = vmatprep.subr.mxu0 0.0
        %354 = vmatpush1.msra.mxu0 0.0
        %355 = vmatprep.subr.mxu0 0.0
        %356 = vmatpush1.msra.mxu0 0.0
        %357 = vmatprep.subr.mxu0 0.0
        %358 = vmatpush1.msra.mxu0 0.0
        %359 = vmatprep.subr.mxu0 0.0
        %360 = vmatpush1.msra.mxu0 0.0
        %361 = vmatprep.subr.mxu0 0.0
        %362 = vmatpush1.msra.mxu0 0.0
        %363 = vmatprep.subr.mxu0 0.0
        %364 = vmatpush1.msra.mxu0 0.0
        %365 = vmatprep.subr.mxu0 0.0
        %366 = vmatpush1.msra.mxu0 0.0
        %367 = vmatprep.subr.mxu0 0.0
        %368 = vmatpush1.msra.mxu0 0.0
        %369 = vmatprep.subr.mxu0 0.0
        %370 = vmatpush1.msra.mxu0 0.0
        %371 = vmatprep.mubr.f32.mxu0 0.0
        %372 = vmatmul.mubr.f32.gmra.mrb[0].mxu0 %v305
        %v373 = vpop.f32.mrb[0].mxu0
        %v374 = vadd.f32 %v301, %v373
        %v375 = vpop.f32.mrb[0].mxu0
        %376 = vdwg.mxu0
        %v377 = vmul.f32 %v374, 0.5
        %v378 = vmul.f32 %v374, %v374
        %v379 = vmul.f32 %v378, %v374
        %v380 = vmul.f32 %v379, 0.044715
        %v381 = vadd.f32 %v374, %v380
        %v382 = vmul.f32 %v381, 0.7978846
        %v383 = vtanh.pop %v382
        %v384 = vadd.f32 %v383, 1.0
        %v385 = vmul.f32 %v377, %v384
        %v386 = vld [vmem:[#allocation2] sm:$0xff]
        %v387 = vld [vmem:[%s283] sm:$0xff]
        %v388 = vld [vmem:[%s283 + $0x8] sm:$0xff]
        %v389 = vld [vmem:[%s283 + $0x10] sm:$0xff]
        %v390 = vld [vmem:[%s283 + $0x18] sm:$0xff]
        %v391 = vld [vmem:[%s283 + $0x20] sm:$0xff]
        %v392 = vld [vmem:[%s283 + $0x28] sm:$0xff]
        %v393 = vld [vmem:[%s283 + $0x30] sm:$0xff]
        %v394 = vld [vmem:[%s283 + $0x38] sm:$0xff]
        %v395 = vld [vmem:[%s283 + $0x40] sm:$0xff]
        %v396 = vld [vmem:[%s283 + $0x48] sm:$0xff]
        %v397 = vld [vmem:[%s283 + $0x50] sm:$0xff]
        %v398 = vld [vmem:[%s283 + $0x58] sm:$0xff]
        %v399 = vld [vmem:[%s283 + $0x60] sm:$0xff]
        %v400 = vld [vmem:[%s283 + $0x68] sm:$0xff]
        %v401 = vld [vmem:[%s283 + $0x70] sm:$0xff]
        %v402 = vld [vmem:[%s283 + $0x78] sm:$0xff]
        %403 = vmatprep.subr.mxu0 0.0
        %404 = vmatpush1.msra.mxu0 %v387
        %405 = vmatprep.subr.mxu0 0.0
        %406 = vmatpush1.msra.mxu0 %v388
        %407 = vmatprep.subr.mxu0 0.0
        %408 = vmatpush1.msra.mxu0 %v389
        %409 = vmatprep.subr.mxu0 0.0
        %410 = vmatpush1.msra.mxu0 %v390
        %411 = vmatprep.subr.mxu0 0.0
        %412 = vmatpush1.msra.mxu0 %v391
        %413 = vmatprep.subr.mxu0 0.0
        %414 = vmatpush1.msra.mxu0 %v392
        %415 = vmatprep.subr.mxu0 0.0
        %416 = vmatpush1.msra.mxu0 %v393
        %417 = vmatprep.subr.mxu0 0.0
        %418 = vmatpush1.msra.mxu0 %v394
        %419 = vmatprep.subr.mxu0 0.0
        %420 = vmatpush1.msra.mxu0 %v395
        %421 = vmatprep.subr.mxu0 0.0
        %422 = vmatpush1.msra.mxu0 %v396
        %423 = vmatprep.subr.mxu0 0.0
        %424 = vmatpush1.msra.mxu0 %v397
        %425 = vmatprep.subr.mxu0 0.0
        %426 = vmatpush1.msra.mxu0 %v398
        %427 = vmatprep.subr.mxu0 0.0
        %428 = vmatpush1.msra.mxu0 %v399
        %429 = vmatprep.subr.mxu0 0.0
        %430 = vmatpush1.msra.mxu0 %v400
        %431 = vmatprep.subr.mxu0 0.0
        %432 = vmatpush1.msra.mxu0 %v401
        %433 = vmatprep.subr.mxu0 0.0
        %434 = vmatpush1.msra.mxu0 %v402
        %435 = vmatprep.subr.mxu0 0.0
        %436 = vmatpush1.msra.mxu0 0.0
        %437 = vmatprep.subr.mxu0 0.0
        %438 = vmatpush1.msra.mxu0 0.0
        %439 = vmatprep.subr.mxu0 0.0
        %440 = vmatpush1.msra.mxu0 0.0
        %441 = vmatprep.subr.mxu0 0.0
        %442 = vmatpush1.msra.mxu0 0.0
        %443 = vmatprep.subr.mxu0 0.0
        %444 = vmatpush1.msra.mxu0 0.0
        %445 = vmatprep.subr.mxu0 0.0
        %446 = vmatpush1.msra.mxu0 0.0
        %447 = vmatprep.subr.mxu0 0.0
        %448 = vmatpush1.msra.mxu0 0.0
        %449 = vmatprep.subr.mxu0 0.0
        %450 = vmatpush1.msra.mxu0 0.0
        %451 = vmatprep.subr.mxu0 0.0
        %452 = vmatpush1.msra.mxu0 0.0
        %453 = vmatprep.subr.mxu0 0.0
        %454 = vmatpush1.msra.mxu0 0.0
        %455 = vmatprep.subr.mxu0 0.0
        %456 = vmatpush1.msra.mxu0 0.0
        %457 = vmatprep.subr.mxu0 0.0
        %458 = vmatpush1.msra.mxu0 0.0
        %459 = vmatprep.subr.mxu0 0.0
        %460 = vmatpush1.msra.mxu0 0.0
        %461 = vmatprep.subr.mxu0 0.0
        %462 = vmatpush1.msra.mxu0 0.0
        %463 = vmatprep.subr.mxu0 0.0
        %464 = vmatpush1.msra.mxu0 0.0
        %465 = vmatprep.subr.mxu0 0.0
        %466 = vmatpush1.msra.mxu0 0.0
        %467 = vmatprep.mubr.f32.mxu0 0.0
        %468 = vmatmul.mubr.f32.gmra.mrb[0].mxu0 %v385
        %v469 = vpop.f32.mrb[0].mxu0
        %v470 = vadd.f32 0.0, %v469
        %v471 = vpop.f32.mrb[0].mxu0
        %472 = vdwg.mxu0
        %v473 = vadd.f32 %v386, %v470
        %474 = vst.msk [vmem:[#allocation2] sm:$0xff] %vm303, %v473
        // Predicated region
        $region45: #{mlp_forward.1} parent=39 // pred_check
          %p475 = pneg %p285
        $region46: #{mlp_forward.1} parent=39 // pred_check_branch
          %477 = sbr.rel (%p475) target = $region48
        $region47: #{mlp_forward.1} parent=39 // pred_region
          %v478 = vld [vmem:[#allocation2] sm:$0xff]
          %v479 = vld [vmem:[%s4] sm:$0x1]
          %v481 = vlaneseq
          %v482 = vshrl.u32 %v481, 7
          %v483 = vsub.s32 0, %v482
          %v484 = vrot.slane %v479, %v483
          %v486 = vadd.f32 %v478, %v484
          %487 = vst.msk [vmem:[%s267] sm:$0xff] %vm303, %v486
        $region48: #{mlp_forward.1} parent=39 // pred_fallthru
          _
        %s488 = sand.u32 %s164, 1
        %s489 = scalar_lea.sflag [#allocation4], %s488
        %s490 = sand.u32 %s164, 1
        %s491 = smul.addr %s490, 8
        %s492 = scalar_lea.vmem [#allocation3], %s491
        // Predicated region
        $region49: #{mlp_forward.1} parent=39 // pred_check
          %p493 = pneg %p174
        $region50: #{mlp_forward.1} parent=39 // pred_check_branch
          %495 = sbr.rel (%p493) target = $region52
        $region51: #{mlp_forward.1} parent=39 // pred_region
          %s497 = ssub.s32 128, 128
          %498 = vsyncadd %s489, %s497
          %s499 = smul.addr %s23, 128
          %s500 = scalar_lea.hbm %s5, %s499
          %s502 = sshll.u32 %s492, 4
          %s503 = int_to_ptr.vmem [resolvable:$true] %s502
          %505 = dma.vmem_to_hbm [thread:$0]  %s503, 128, %s500, %s489
        $region52: #{mlp_forward.1} parent=39 // pred_fallthru
          _
      $region40: #{mlp_forward.1} parent=5 // pred_fallthru
        _
      %p506 = scmp.le.s32.totalorder 2, %s14
      // Predicated region
      $region53: #{mlp_forward.1} parent=5 // pred_check
        %p507 = pneg %p506
      $region54: #{mlp_forward.1} parent=5 // pred_check_branch
        %509 = sbr.rel (%p507) target = $region56
      $region55: #{mlp_forward.1} parent=5 // pred_region
        %s510 = ssub.s32 %s14, 2
        // Predicated region
        $region57: #{mlp_forward.1} parent=55 // pred_check
          %p511 = pneg %p180
        $region58: #{mlp_forward.1} parent=55 // pred_check_branch
          %513 = sbr.rel (%p511) target = $region60
        $region59: #{mlp_forward.1} parent=55 // pred_region
          %s514 = sand.u32 %s165, 1
          %s515 = scalar_lea.sflag [#allocation4], %s514
          %s516 = sand.u32 %s165, 1
          %s517 = smul.addr %s516, 8
          %s518 = scalar_lea.vmem [#allocation3], %s517
          %519 = dma.done %s515, 128
        $region60: #{mlp_forward.1} parent=55 // pred_fallthru
          _
      $region56: #{mlp_forward.1} parent=5 // pred_fallthru
        _
    $region6: #{mlp_forward.1} parent=1 // loop_footer
      %s18 = sadd.s32 1, %s14
    $region7: #{mlp_forward.1} parent=1 // loop_footer_branch
      %13 = sbr.rel target = $region3
    $region8: #{mlp_forward.1} parent=1 // loop_exit
      _
    %520 = vsyncpa [#allocation4], 1
    %s521 = scalar_lea.sflag [#allocation4], 1
    %522 = vsyncpa %s521, 1

</llo_original>
